<compile_context>
chip_gen: v5e
topology: v5e:2x2
jax: 0.10.0
libtpu: 0.0.40
codegen_flags: <defaults>
</compile_context>

<pallas_src>
import functools
import math

import jax
import jax.numpy as jnp
from jax.experimental import pallas as pl
from jax.experimental.pallas import tpu as pltpu


# ------------------------- Pallas kernel ------------------------------------


def mha_kernel(q_ref, kv_ref, wq_ref, bq_ref, wkv_ref, bkv_ref, wo_ref, bo_ref,
               o_ref, *, num_heads, approx_recip):
    """One batch element of nn.MultiheadAttention(query, kv, kv), eval mode.

    Refs (batch dim squeezed away by pl.Squeezed()):
      q_ref:   (Lq, D)      kv_ref:  (Lk, D)
      wq_ref:  (D, D)  (1/sqrt(hd) pre-folded)     bq_ref:  (1, D)
      wkv_ref: (D, 2D) (Wk | Wv fused)             bkv_ref: (1, 2D)
      wo_ref:  (D, D)                              bo_ref:  (1, D)
      o_ref:   (Lq, D)
    """
    lq, D = q_ref.shape
    hd = D // num_heads
    mm = wq_ref.dtype  # matmul operand dtype (bf16 fast path / f32 precise path)

    # Input projections: two wide matmuls, f32 accumulation, f32 bias add.
    q = jnp.dot(q_ref[...].astype(mm), wq_ref[...],
                preferred_element_type=jnp.float32) + bq_ref[...]          # (Lq, D)
    kvp = jnp.dot(kv_ref[...].astype(mm), wkv_ref[...],
                  preferred_element_type=jnp.float32) + bkv_ref[...]       # (Lk, 2D)

    # One relayout: gather each head's lane slice into a leading "head" batch dim so all
    # heads share two batched MXU contractions instead of per-head tiny matmuls.
    def heads(x):
        return jnp.stack(
            [x[:, h * hd:(h + 1) * hd] for h in range(num_heads)], axis=0
        ).astype(mm)

    qh = heads(q)              # (H, Lq, hd)
    kh = heads(kvp[:, :D])     # (H, Lk, hd)
    vh = heads(kvp[:, D:])     # (H, Lk, hd)

    # Scores: contract last dims directly (no explicit K transpose). Softmax in f32.
    s = jnp.einsum('hqd,hkd->hqk', qh, kh,
                   preferred_element_type=jnp.float32)                     # (H, Lq, Lk)
    s = s - jnp.max(s, axis=-1, keepdims=True)
    p = jnp.exp(s)
    denom = jnp.sum(p, axis=-1, keepdims=True)
    if approx_recip:
        inv = pl.reciprocal(denom, approx=True)       # EUP slot, ~free
    else:
        inv = 1.0 / denom                             # exact debug path
    ctx = jnp.einsum('hqk,hkd->hqd', p.astype(mm), vh,
                     preferred_element_type=jnp.float32) * inv             # (H, Lq, hd)

    # Concatenate heads back along lanes -> (Lq, D); single out-projection matmul.
    ctx_flat = jnp.concatenate([ctx[h] for h in range(num_heads)], axis=-1)
    out = jnp.dot(ctx_flat.astype(mm), wo_ref[...],
                  preferred_element_type=jnp.float32) + bo_ref[...]
    o_ref[...] = out.astype(o_ref.dtype)


# ------------------------- parameter preparation (run once, not per call) ---


def prepare_params(params, *, num_heads, matmul_dtype=jnp.bfloat16):
    """One-time weight orientation, hoisted out of the per-forward path.

    Splits PyTorch's packed in_proj, transposes everything for x @ W, fuses the K/V
    projections into a single (D, 2D) matrix, folds 1/sqrt(head_dim) into Wq/bq, and
    casts matmul operands to `matmul_dtype` (biases stay f32: added to f32 accumulators).
    """
    D = params["out_proj_weight"].shape[0]
    assert D % num_heads == 0
    scale = 1.0 / math.sqrt(D // num_heads)
    w_in, b_in = params["in_proj_weight"], params["in_proj_bias"]
    wq = (w_in[0 * D:1 * D].T * scale).astype(matmul_dtype)
    bq = (b_in[0 * D:1 * D] * scale)[None, :].astype(jnp.float32)
    wkv = jnp.concatenate([w_in[1 * D:2 * D].T, w_in[2 * D:3 * D].T],
                          axis=1).astype(matmul_dtype)
    bkv = jnp.concatenate([b_in[1 * D:2 * D], b_in[2 * D:3 * D]])[None, :].astype(
        jnp.float32)
    wo = params["out_proj_weight"].T.astype(matmul_dtype)
    bo = params["out_proj_bias"][None, :].astype(jnp.float32)
    return {"wq": wq, "bq": bq, "wkv": wkv, "bkv": bkv, "wo": wo, "bo": bo}


# ------------------------- wrapper ------------------------------------------


def cross_attention_forward(query, kv, oriented, *, num_heads, approx_recip=True):
    """query: (B, Lq, D), kv: (B, Lk, D) -> (B, Lq, D)."""
    B, Lq, D = query.shape
    _, Lk, _ = kv.shape
    assert D % num_heads == 0

    kernel = functools.partial(mha_kernel, num_heads=num_heads,
                               approx_recip=approx_recip)

    def w_spec(shape):
        # Constant block index -> weights stay VMEM-resident across the whole grid.
        return pl.BlockSpec(shape, lambda b: (0, 0))

    return pl.pallas_call(
        kernel,
        out_shape=jax.ShapeDtypeStruct((B, Lq, D), query.dtype),
        grid=(B,),
        in_specs=[
            pl.BlockSpec((pl.Squeezed(), Lq, D), lambda b: (b, 0, 0)),   # query
            pl.BlockSpec((pl.Squeezed(), Lk, D), lambda b: (b, 0, 0)),   # kv
            w_spec((D, D)), w_spec((1, D)),          # Wq (scale folded), bq
            w_spec((D, 2 * D)), w_spec((1, 2 * D)),  # Wk|Wv fused, bk|bv
            w_spec((D, D)), w_spec((1, D)),          # Wo, bo
        ],
        out_specs=pl.BlockSpec((pl.Squeezed(), Lq, D), lambda b: (b, 0, 0)),
        compiler_params=pltpu.CompilerParams(
            dimension_semantics=("parallel",)),
    )(query, kv, oriented["wq"], oriented["bq"], oriented["wkv"],
      oriented["bkv"], oriented["wo"], oriented["bo"])


# ------------------------- pure-JAX reference (PyTorch semantics) ------------


def cross_attention_ref(query, kv, params, *, num_heads):
    B, Lq, D = query.shape
    Lk = kv.shape[1]
    hd = D // num_heads
    w_in, b_in = params["in_proj_weight"], params["in_proj_bias"]
    q = query @ w_in[0 * D:1 * D].T + b_in[0 * D:1 * D]
    k = kv @ w_in[1 * D:2 * D].T + b_in[1 * D:2 * D]
    v = kv @ w_in[2 * D:3 * D].T + b_in[2 * D:3 * D]
    q = q.reshape(B, Lq, num_heads, hd).transpose(0, 2, 1, 3)
    k = k.reshape(B, Lk, num_heads, hd).transpose(0, 2, 1, 3)
    v = v.reshape(B, Lk, num_heads, hd).transpose(0, 2, 1, 3)
    s = jnp.einsum("bhqd,bhkd->bhqk", q, k) / math.sqrt(hd)
    p = jax.nn.softmax(s, axis=-1)
    ctx = jnp.einsum("bhqk,bhkd->bhqd", p, v)
    ctx = ctx.transpose(0, 2, 1, 3).reshape(B, Lq, D)
    return ctx @ params["out_proj_weight"].T + params["out_proj_bias"]


# ------------------------- deterministic parameter init ----------------------


def init_params(key, embed_dim):
    k1, k2, k3, k4 = jax.random.split(key, 4)
    s = 1.0 / math.sqrt(embed_dim)
    return {
        "in_proj_weight": s * jax.random.normal(
            k1, (3 * embed_dim, embed_dim), jnp.float32),
        "in_proj_bias": 0.02 * jax.random.normal(
            k2, (3 * embed_dim,), jnp.float32),
        "out_proj_weight": s * jax.random.normal(
            k3, (embed_dim, embed_dim), jnp.float32),
        "out_proj_bias": 0.02 * jax.random.normal(
            k4, (embed_dim,), jnp.float32),
    }


# ------------------------- main ----------------------------------------------

if __name__ == "__main__":
    batch, len_q, len_kv = 2, 8, 16
    embed_dim, num_heads = 32, 4

    key = jax.random.PRNGKey(0)
    kq, kkv, kp = jax.random.split(key, 3)
    query = jax.random.normal(kq, (batch, len_q, embed_dim), jnp.float32)
    kv = jax.random.normal(kkv, (batch, len_kv, embed_dim), jnp.float32)
    params = init_params(kp, embed_dim)
    ref = cross_attention_ref(query, kv, params, num_heads=num_heads)

    # Precise debug path: f32 matmul operands + exact softmax reciprocal (tight tolerance).
    p_f32 = prepare_params(params, num_heads=num_heads, matmul_dtype=jnp.float32)
    out = cross_attention_forward(query, kv, p_f32, num_heads=num_heads,
                                  approx_recip=False)
    out = jax.block_until_ready(out)
    assert out.shape == (batch, len_q, embed_dim), out.shape
    assert bool(jnp.all(jnp.isfinite(out)))
    err = float(jnp.max(jnp.abs(out - ref)))
    assert err < 1e-3, f"precise path max abs err {err}"

    # Fast path (production default): bf16 MXU operands, f32 accumulation, f32 softmax,
    # approx EUP reciprocal for the softmax denominator.
    p_bf16 = prepare_params(params, num_heads=num_heads, matmul_dtype=jnp.bfloat16)
    out_fast = cross_attention_forward(query, kv, p_bf16, num_heads=num_heads,
                                       approx_recip=True)
    out_fast = jax.block_until_ready(out_fast)
    assert bool(jnp.all(jnp.isfinite(out_fast)))
    err_fast = float(jnp.max(jnp.abs(out_fast - ref)))
    assert err_fast < 8e-2, f"bf16 path max abs err {err_fast}"

    # TODO(synk): dropout inside nn.MultiheadAttention is identity in eval mode and is
    # intentionally omitted (no stochastic op in the kernel).
    print("KERNEL_OK")
</pallas_src>

<mosaic_0001>
module attributes {stable_mosaic.version = 11 : i64} {
  func.func @mha_kernel(%arg0: i32, %arg1: memref<1x8x32xf32, #tpu.memory_space<vmem>>, %arg2: memref<1x16x32xf32, #tpu.memory_space<vmem>>, %arg3: memref<32x32xf32, #tpu.memory_space<vmem>>, %arg4: memref<1x32xf32, #tpu.memory_space<vmem>>, %arg5: memref<32x64xf32, #tpu.memory_space<vmem>>, %arg6: memref<1x64xf32, #tpu.memory_space<vmem>>, %arg7: memref<32x32xf32, #tpu.memory_space<vmem>>, %arg8: memref<1x32xf32, #tpu.memory_space<vmem>>, %arg9: memref<1x8x32xf32, #tpu.memory_space<vmem>>) attributes {dimension_semantics = [#tpu.dimension_semantics<parallel>], iteration_bounds = array<i64: 2>, scalar_prefetch = 0 : i64, scratch_operands = 0 : i64, tpu.core_type = #tpu.core_type<tc>, window_params = [{transform_indices = @transform_0, window_bounds = array<i64: 1, 8, 32>}, {transform_indices = @transform_1, window_bounds = array<i64: 1, 16, 32>}, {pipeline_mode = #tpu.pipeline_mode<synchronous>, transform_indices = @transform_2, window_bounds = array<i64: 32, 32>}, {pipeline_mode = #tpu.pipeline_mode<synchronous>, transform_indices = @transform_3, window_bounds = array<i64: 1, 32>}, {pipeline_mode = #tpu.pipeline_mode<synchronous>, transform_indices = @transform_4, window_bounds = array<i64: 32, 64>}, {pipeline_mode = #tpu.pipeline_mode<synchronous>, transform_indices = @transform_5, window_bounds = array<i64: 1, 64>}, {pipeline_mode = #tpu.pipeline_mode<synchronous>, transform_indices = @transform_6, window_bounds = array<i64: 32, 32>}, {pipeline_mode = #tpu.pipeline_mode<synchronous>, transform_indices = @transform_7, window_bounds = array<i64: 1, 32>}, {transform_indices = @transform_8, window_bounds = array<i64: 1, 8, 32>}]} {
    %c0 = arith.constant 0 : index
    %c0_0 = arith.constant 0 : index
    %c0_1 = arith.constant 0 : index
    %0 = vector.load %arg1[%c0, %c0_0, %c0_1] : memref<1x8x32xf32, #tpu.memory_space<vmem>>, vector<1x8x32xf32>
    %1 = vector.shape_cast %0 : vector<1x8x32xf32> to vector<8x32xf32>
    %c0_2 = arith.constant 0 : index
    %c0_3 = arith.constant 0 : index
    %2 = vector.load %arg3[%c0_2, %c0_3] : memref<32x32xf32, #tpu.memory_space<vmem>>, vector<32x32xf32>
    %cst = arith.constant dense<0.000000e+00> : vector<8x32xf32>
    %3 = tpu.matmul %1, %2, %cst {dimension_numbers = #tpu.dot_dimension_numbers<[1], [0], [0], [1], [0, 0, 1, 1], [], []>} : vector<8x32xf32>, vector<32x32xf32>, vector<8x32xf32> -> vector<8x32xf32>
    %c0_4 = arith.constant 0 : index
    %c0_5 = arith.constant 0 : index
    %4 = vector.load %arg4[%c0_4, %c0_5] : memref<1x32xf32, #tpu.memory_space<vmem>>, vector<1x32xf32>
    %5 = vector.broadcast %4 : vector<1x32xf32> to vector<8x32xf32>
    %6 = arith.addf %3, %5 : vector<8x32xf32>
    %c0_6 = arith.constant 0 : index
    %c0_7 = arith.constant 0 : index
    %c0_8 = arith.constant 0 : index
    %7 = vector.load %arg2[%c0_6, %c0_7, %c0_8] : memref<1x16x32xf32, #tpu.memory_space<vmem>>, vector<1x16x32xf32>
    %8 = vector.shape_cast %7 : vector<1x16x32xf32> to vector<16x32xf32>
    %c0_9 = arith.constant 0 : index
    %c0_10 = arith.constant 0 : index
    %9 = vector.load %arg5[%c0_9, %c0_10] : memref<32x64xf32, #tpu.memory_space<vmem>>, vector<32x64xf32>
    %cst_11 = arith.constant dense<0.000000e+00> : vector<16x64xf32>
    %10 = tpu.matmul %8, %9, %cst_11 {dimension_numbers = #tpu.dot_dimension_numbers<[1], [0], [0], [1], [0, 0, 1, 1], [], []>} : vector<16x32xf32>, vector<32x64xf32>, vector<16x64xf32> -> vector<16x64xf32>
    %c0_12 = arith.constant 0 : index
    %c0_13 = arith.constant 0 : index
    %11 = vector.load %arg6[%c0_12, %c0_13] : memref<1x64xf32, #tpu.memory_space<vmem>>, vector<1x64xf32>
    %12 = vector.broadcast %11 : vector<1x64xf32> to vector<16x64xf32>
    %13 = arith.addf %10, %12 : vector<16x64xf32>
    %14 = vector.extract_strided_slice %6 {offsets = [0, 0], sizes = [8, 8], strides = [1, 1]} : vector<8x32xf32> to vector<8x8xf32>
    %15 = vector.extract_strided_slice %6 {offsets = [0, 8], sizes = [8, 8], strides = [1, 1]} : vector<8x32xf32> to vector<8x8xf32>
    %16 = vector.extract_strided_slice %6 {offsets = [0, 16], sizes = [8, 8], strides = [1, 1]} : vector<8x32xf32> to vector<8x8xf32>
    %17 = vector.extract_strided_slice %6 {offsets = [0, 24], sizes = [8, 8], strides = [1, 1]} : vector<8x32xf32> to vector<8x8xf32>
    %18 = vector.shape_cast %14 : vector<8x8xf32> to vector<1x8x8xf32>
    %19 = vector.shape_cast %15 : vector<8x8xf32> to vector<1x8x8xf32>
    %20 = vector.shape_cast %16 : vector<8x8xf32> to vector<1x8x8xf32>
    %21 = vector.shape_cast %17 : vector<8x8xf32> to vector<1x8x8xf32>
    %22 = tpu.concatenate %18, %19, %20, %21 in 0 : vector<1x8x8xf32>, vector<1x8x8xf32>, vector<1x8x8xf32>, vector<1x8x8xf32> -> vector<4x8x8xf32>
    %23 = vector.extract_strided_slice %13 {offsets = [0, 0], sizes = [16, 32], strides = [1, 1]} : vector<16x64xf32> to vector<16x32xf32>
    %24 = vector.extract_strided_slice %23 {offsets = [0, 0], sizes = [16, 8], strides = [1, 1]} : vector<16x32xf32> to vector<16x8xf32>
    %25 = vector.extract_strided_slice %23 {offsets = [0, 8], sizes = [16, 8], strides = [1, 1]} : vector<16x32xf32> to vector<16x8xf32>
    %26 = vector.extract_strided_slice %23 {offsets = [0, 16], sizes = [16, 8], strides = [1, 1]} : vector<16x32xf32> to vector<16x8xf32>
    %27 = vector.extract_strided_slice %23 {offsets = [0, 24], sizes = [16, 8], strides = [1, 1]} : vector<16x32xf32> to vector<16x8xf32>
    %28 = vector.shape_cast %24 : vector<16x8xf32> to vector<1x16x8xf32>
    %29 = vector.shape_cast %25 : vector<16x8xf32> to vector<1x16x8xf32>
    %30 = vector.shape_cast %26 : vector<16x8xf32> to vector<1x16x8xf32>
    %31 = vector.shape_cast %27 : vector<16x8xf32> to vector<1x16x8xf32>
    %32 = tpu.concatenate %28, %29, %30, %31 in 0 : vector<1x16x8xf32>, vector<1x16x8xf32>, vector<1x16x8xf32>, vector<1x16x8xf32> -> vector<4x16x8xf32>
    %33 = vector.extract_strided_slice %13 {offsets = [0, 32], sizes = [16, 32], strides = [1, 1]} : vector<16x64xf32> to vector<16x32xf32>
    %34 = vector.extract_strided_slice %33 {offsets = [0, 0], sizes = [16, 8], strides = [1, 1]} : vector<16x32xf32> to vector<16x8xf32>
    %35 = vector.extract_strided_slice %33 {offsets = [0, 8], sizes = [16, 8], strides = [1, 1]} : vector<16x32xf32> to vector<16x8xf32>
    %36 = vector.extract_strided_slice %33 {offsets = [0, 16], sizes = [16, 8], strides = [1, 1]} : vector<16x32xf32> to vector<16x8xf32>
    %37 = vector.extract_strided_slice %33 {offsets = [0, 24], sizes = [16, 8], strides = [1, 1]} : vector<16x32xf32> to vector<16x8xf32>
    %38 = vector.shape_cast %34 : vector<16x8xf32> to vector<1x16x8xf32>
    %39 = vector.shape_cast %35 : vector<16x8xf32> to vector<1x16x8xf32>
    %40 = vector.shape_cast %36 : vector<16x8xf32> to vector<1x16x8xf32>
    %41 = vector.shape_cast %37 : vector<16x8xf32> to vector<1x16x8xf32>
    %42 = tpu.concatenate %38, %39, %40, %41 in 0 : vector<1x16x8xf32>, vector<1x16x8xf32>, vector<1x16x8xf32>, vector<1x16x8xf32> -> vector<4x16x8xf32>
    "tpu.trace_start"() <{level = 10 : i32, message = "hqd,hkd->hqk"}> : () -> ()
    %cst_14 = arith.constant dense<0.000000e+00> : vector<4x8x16xf32>
    %43 = tpu.matmul %22, %32, %cst_14 {dimension_numbers = #tpu.dot_dimension_numbers<[2], [2], [1], [1], [0, 0, 0, 1, 1, 1], [0], [0]>} : vector<4x8x8xf32>, vector<4x16x8xf32>, vector<4x8x16xf32> -> vector<4x8x16xf32>
    "tpu.trace_stop"() : () -> ()
    %cst_15 = arith.constant dense<0xFF800000> : vector<4x8xf32>
    %44 = vector.multi_reduction <maximumf>, %43, %cst_15 [2] : vector<4x8x16xf32> to vector<4x8xf32>
    %45 = vector.shape_cast %44 : vector<4x8xf32> to vector<4x8x1xf32>
    %46 = vector.broadcast %45 : vector<4x8x1xf32> to vector<4x8x16xf32>
    %47 = arith.subf %43, %46 : vector<4x8x16xf32>
    %48 = math.exp %47 : vector<4x8x16xf32>
    %cst_16 = arith.constant dense<0.000000e+00> : vector<4x8xf32>
    %49 = vector.multi_reduction <add>, %48, %cst_16 [2] : vector<4x8x16xf32> to vector<4x8xf32>
    %50 = vector.shape_cast %49 : vector<4x8xf32> to vector<4x8x1xf32>
    %cst_17 = arith.constant 1.000000e+00 : f32
    %51 = vector.broadcast %cst_17 : f32 to vector<4x8x1xf32>
    %52 = arith.divf %51, %50 : vector<4x8x1xf32>
    "tpu.trace_start"() <{level = 10 : i32, message = "hqk,hkd->hqd"}> : () -> ()
    %cst_18 = arith.constant dense<0.000000e+00> : vector<4x8x8xf32>
    %53 = tpu.matmul %48, %42, %cst_18 {dimension_numbers = #tpu.dot_dimension_numbers<[2], [1], [1], [2], [0, 0, 0, 1, 1, 2], [0], [0]>} : vector<4x8x16xf32>, vector<4x16x8xf32>, vector<4x8x8xf32> -> vector<4x8x8xf32>
    "tpu.trace_stop"() : () -> ()
    %54 = vector.broadcast %52 : vector<4x8x1xf32> to vector<4x8x8xf32>
    %55 = arith.mulf %53, %54 : vector<4x8x8xf32>
    %56 = vector.extract_strided_slice %55 {offsets = [0, 0, 0], sizes = [1, 8, 8], strides = [1, 1, 1]} : vector<4x8x8xf32> to vector<1x8x8xf32>
    %57 = vector.shape_cast %56 : vector<1x8x8xf32> to vector<8x8xf32>
    %58 = vector.extract_strided_slice %55 {offsets = [1, 0, 0], sizes = [1, 8, 8], strides = [1, 1, 1]} : vector<4x8x8xf32> to vector<1x8x8xf32>
    %59 = vector.shape_cast %58 : vector<1x8x8xf32> to vector<8x8xf32>
    %60 = vector.extract_strided_slice %55 {offsets = [2, 0, 0], sizes = [1, 8, 8], strides = [1, 1, 1]} : vector<4x8x8xf32> to vector<1x8x8xf32>
    %61 = vector.shape_cast %60 : vector<1x8x8xf32> to vector<8x8xf32>
    %62 = vector.extract_strided_slice %55 {offsets = [3, 0, 0], sizes = [1, 8, 8], strides = [1, 1, 1]} : vector<4x8x8xf32> to vector<1x8x8xf32>
    %63 = vector.shape_cast %62 : vector<1x8x8xf32> to vector<8x8xf32>
    %64 = tpu.concatenate %57, %59, %61, %63 in 1 : vector<8x8xf32>, vector<8x8xf32>, vector<8x8xf32>, vector<8x8xf32> -> vector<8x32xf32>
    %c0_19 = arith.constant 0 : index
    %c0_20 = arith.constant 0 : index
    %65 = vector.load %arg7[%c0_19, %c0_20] : memref<32x32xf32, #tpu.memory_space<vmem>>, vector<32x32xf32>
    %cst_21 = arith.constant dense<0.000000e+00> : vector<8x32xf32>
    %66 = tpu.matmul %64, %65, %cst_21 {dimension_numbers = #tpu.dot_dimension_numbers<[1], [0], [0], [1], [0, 0, 1, 1], [], []>} : vector<8x32xf32>, vector<32x32xf32>, vector<8x32xf32> -> vector<8x32xf32>
    %c0_22 = arith.constant 0 : index
    %c0_23 = arith.constant 0 : index
    %67 = vector.load %arg8[%c0_22, %c0_23] : memref<1x32xf32, #tpu.memory_space<vmem>>, vector<1x32xf32>
    %68 = vector.broadcast %67 : vector<1x32xf32> to vector<8x32xf32>
    %69 = arith.addf %66, %68 : vector<8x32xf32>
    %c0_24 = arith.constant 0 : index
    %c0_25 = arith.constant 0 : index
    %c0_26 = arith.constant 0 : index
    %70 = vector.load %arg9[%c0_24, %c0_25, %c0_26] : memref<1x8x32xf32, #tpu.memory_space<vmem>>, vector<1x8x32xf32>
    %71 = vector.shape_cast %70 : vector<1x8x32xf32> to vector<8x32xf32>
    %72 = vector.shape_cast %69 : vector<8x32xf32> to vector<1x8x32xf32>
    tpu.vector_store %arg9[%c0_24, %c0_25, %c0_26], %72 {strides = array<i32>} : memref<1x8x32xf32, #tpu.memory_space<vmem>>, vector<1x8x32xf32>,
    return
  }
  func.func @transform_0(%arg0: i32) -> (i32, i32, i32) {
    %c0_i32 = arith.constant 0 : i32
    %c0_i32_0 = arith.constant 0 : i32
    %c0_i32_1 = arith.constant 0 : i32
    return %arg0, %c0_i32, %c0_i32_0 : i32, i32, i32
  }
  func.func @transform_1(%arg0: i32) -> (i32, i32, i32) {
    %c0_i32 = arith.constant 0 : i32
    %c0_i32_0 = arith.constant 0 : i32
    %c0_i32_1 = arith.constant 0 : i32
    return %arg0, %c0_i32, %c0_i32_0 : i32, i32, i32
  }
  func.func @transform_2(%arg0: i32) -> (i32, i32) {
    %c0_i32 = arith.constant 0 : i32
    %c0_i32_0 = arith.constant 0 : i32
    %c0_i32_1 = arith.constant 0 : i32
    return %c0_i32, %c0_i32_0 : i32, i32
  }
  func.func @transform_3(%arg0: i32) -> (i32, i32) {
    %c0_i32 = arith.constant 0 : i32
    %c0_i32_0 = arith.constant 0 : i32
    %c0_i32_1 = arith.constant 0 : i32
    return %c0_i32, %c0_i32_0 : i32, i32
  }
  func.func @transform_4(%arg0: i32) -> (i32, i32) {
    %c0_i32 = arith.constant 0 : i32
    %c0_i32_0 = arith.constant 0 : i32
    %c0_i32_1 = arith.constant 0 : i32
    return %c0_i32, %c0_i32_0 : i32, i32
  }
  func.func @transform_5(%arg0: i32) -> (i32, i32) {
    %c0_i32 = arith.constant 0 : i32
    %c0_i32_0 = arith.constant 0 : i32
    %c0_i32_1 = arith.constant 0 : i32
    return %c0_i32, %c0_i32_0 : i32, i32
  }
  func.func @transform_6(%arg0: i32) -> (i32, i32) {
    %c0_i32 = arith.constant 0 : i32
    %c0_i32_0 = arith.constant 0 : i32
    %c0_i32_1 = arith.constant 0 : i32
    return %c0_i32, %c0_i32_0 : i32, i32
  }
  func.func @transform_7(%arg0: i32) -> (i32, i32) {
    %c0_i32 = arith.constant 0 : i32
    %c0_i32_0 = arith.constant 0 : i32
    %c0_i32_1 = arith.constant 0 : i32
    return %c0_i32, %c0_i32_0 : i32, i32
  }
  func.func @transform_8(%arg0: i32) -> (i32, i32, i32) {
    %c0_i32 = arith.constant 0 : i32
    %c0_i32_0 = arith.constant 0 : i32
    %c0_i32_1 = arith.constant 0 : i32
    return %arg0, %c0_i32, %c0_i32_0 : i32, i32, i32
  }
}

</mosaic_0001>

<llo_original>
// kernel: tpu_custom_call.1
$region0: #{tpu_custom_call.1}
  #allocation0 [shape = 'u32[]', space=smem, size = 0x4, offset = 0x4, fixed_abs, tag = 'smem constant byte address 0x4 - core index']
  #allocation1 [shape = 'u32[72,128]{1,0:T(1,128)}', space=vmem, size = 0x9000, scoped, tag = 'internal scratch']
  %s0 = inlined_call_operand.hbm [shape: f32[2,8,32], index: 0, kind: input, shape index: {}]
  %s1 = inlined_call_operand.hbm [shape: f32[2,16,32], index: 1, kind: input, shape index: {}]
  %s2 = inlined_call_operand.hbm [shape: f32[32,32], index: 2, kind: input, shape index: {}]
  %s3 = inlined_call_operand.vmem [shape: f32[1,32], index: 3, kind: input, shape index: {}]
  %s4 = inlined_call_operand.hbm [shape: f32[32,64], index: 4, kind: input, shape index: {}]
  %s5 = inlined_call_operand.vmem [shape: f32[1,64], index: 5, kind: input, shape index: {}]
  %s6 = inlined_call_operand.hbm [shape: f32[32,32], index: 6, kind: input, shape index: {}]
  %s7 = inlined_call_operand.vmem [shape: f32[1,32], index: 7, kind: input, shape index: {}]
  %s8 = inlined_call_operand.hbm [shape: f32[2,8,32], index: 8, kind: output, shape index: {}]
  %s9 = sld [smem:[#allocation0]]
  $region85: #{tpu_custom_call.1} parent=0
    _
  %s11 = ssub.s32 1, %s9
  %s12 = scalar_select 0, %s11, %s9
  $region1: #{tpu_custom_call.1} parent=0
    #allocation2 [shape = 'u8[8192]{0}', space=vmem, size = 0x2000, scoped, tag = 'input window, operand 0']
    #allocation3 [shape = 's32[2]{0}', space=sflag, size = 0x8, scoped, tag = 'scoped memory for tpu_custom_call.1']
    #allocation4 [shape = 's32[2]{0}', space=sflag, size = 0x8, scoped, tag = 'scoped memory for tpu_custom_call.1']
    #allocation5 [shape = 'u8[16384]{0}', space=vmem, size = 0x4000, scoped, tag = 'input window, operand 1']
    #allocation6 [shape = 's32[2]{0}', space=sflag, size = 0x8, scoped, tag = 'scoped memory for tpu_custom_call.1']
    #allocation7 [shape = 'u8[16384]{0}', space=vmem, size = 0x4000, scoped, tag = 'input window, operand 2, single buffered']
    #allocation8 [shape = 'u8[16384]{0}', space=vmem, size = 0x4000, scoped, tag = 'input window, operand 4, single buffered']
    #allocation9 [shape = 's32[1]{0}', space=sflag, size = 0x4, scoped, tag = 'scoped memory for tpu_custom_call.1']
    #allocation10 [shape = 'u8[16384]{0}', space=vmem, size = 0x4000, scoped, tag = 'input window, operand 6, single buffered']
    #allocation11 [shape = 'u8[8192]{0}', space=vmem, size = 0x2000, scoped, tag = 'output window, operand 0']
    %13 = vsyncpa [#allocation3], 0
    %s14 = scalar_lea.sflag [#allocation3], 1
    %15 = vsyncpa %s14, 0
    %16 = vsyncpa [#allocation6], 0
    %s17 = scalar_lea.sflag [#allocation6], 1
    %18 = vsyncpa %s17, 0
    %19 = vsyncpa [#allocation9], 0
    %20 = vsyncpa [#allocation4], 0
    %s21 = scalar_lea.sflag [#allocation4], 1
    %22 = vsyncpa %s21, 0
    loop: start=0, step=1, limit=4
    $region2: #{tpu_custom_call.1} parent=1 // loop_pre_header
      _
    $region3: #{tpu_custom_call.1} parent=1 // loop_header
      %s24 = sphi 0, %s28
      %p25 = scmp.ge.s32.totalorder %s24, 4
      %s34 = sphi 0, %s36
      %s37 = sphi 0, %s34
      %s38 = sphi 0, %s37
      %s54 = sphi 0, %s38
      %s60 = sphi 0, %s62
      %s63 = sphi 0, %s60
      %s64 = sphi 0, %s63
      %s80 = sphi 0, %s64
      %s84 = sphi 0, %s84
      %s86 = sphi 0, %s84
      %s87 = sphi 0, %s86
      %s101 = sphi 0, %s87
      %s105 = sphi 0, %s105
      %s107 = sphi 0, %s105
      %s108 = sphi 0, %s107
      %s122 = sphi 0, %s108
      %s126 = sphi 0, %s126
      %s128 = sphi 0, %s126
      %s129 = sphi 0, %s128
      %s143 = sphi 0, %s129
      %s147 = sphi 0, %s147
      %s149 = sphi 0, %s147
      %s150 = sphi 0, %s149
      %s164 = sphi 0, %s150
      %s168 = sphi 0, %s168
      %s170 = sphi 0, %s168
      %s171 = sphi 0, %s170
      %s185 = sphi 0, %s171
      %s189 = sphi 0, %s189
      %s191 = sphi 0, %s189
      %s192 = sphi 0, %s191
      %s206 = sphi 0, %s192
      %s212 = sphi 0, %s214
      %s215 = sphi 0, %s212
      %s216 = sphi 0, %s215
      %s232 = sphi 0, %s216
    $region4: #{tpu_custom_call.1} parent=1 // loop_header_branch
      %27 = sbr.rel (%p25) target = $region8
    $region5: #{tpu_custom_call.1} parent=1 // loop_body
      %s29 = ssub.s32 %s24, 1
      %s30 = ssub.s32 %s24, 2
      %s31 = sadd.s32 %s24, 1
      %s32 = ssub.s32 %s24, %s31
      %p33 = scmp.eq.s32.totalorder %s32, 0
      %s35 = sadd.s32 %s34, 1
      %s36 = scalar_select %p33, %s34, %s35
      %p39 = pneg %p33
      %p40 = scmp.eq.s32.totalorder %s24, 1
      %p41 = por %p39, %p40
      %p42 = scmp.ne.s32.totalorder %s34, %s37
      %p43 = scmp.eq.s32.totalorder %s24, 0
      %p44 = por %p42, %p43
      %p45 = scmp.ne.s32.totalorder %s34, %s37
      %p46 = scmp.eq.s32.totalorder %s29, 1
      %p47 = por %p45, %p46
      %p48 = scmp.ne.s32.totalorder %s37, %s38
      %p49 = scmp.eq.s32.totalorder %s29, 0
      %p50 = por %p48, %p49
      %p51 = scmp.ne.s32.totalorder %s37, %s38
      %p52 = scmp.eq.s32.totalorder %s30, 1
      %p53 = por %p51, %p52
      %p55 = scmp.ne.s32.totalorder %s38, %s54
      %p56 = scmp.eq.s32.totalorder %s30, 0
      %p57 = por %p55, %p56
      %s58 = ssub.s32 %s24, %s31
      %p59 = scmp.eq.s32.totalorder %s58, 0
      %s61 = sadd.s32 %s60, 1
      %s62 = scalar_select %p59, %s60, %s61
      %p65 = pneg %p59
      %p66 = scmp.eq.s32.totalorder %s24, 1
      %p67 = por %p65, %p66
      %p68 = scmp.ne.s32.totalorder %s60, %s63
      %p69 = scmp.eq.s32.totalorder %s24, 0
      %p70 = por %p68, %p69
      %p71 = scmp.ne.s32.totalorder %s60, %s63
      %p72 = scmp.eq.s32.totalorder %s29, 1
      %p73 = por %p71, %p72
      %p74 = scmp.ne.s32.totalorder %s63, %s64
      %p75 = scmp.eq.s32.totalorder %s29, 0
      %p76 = por %p74, %p75
      %p77 = scmp.ne.s32.totalorder %s63, %s64
      %p78 = scmp.eq.s32.totalorder %s30, 1
      %p79 = por %p77, %p78
      %p81 = scmp.ne.s32.totalorder %s64, %s80
      %p82 = scmp.eq.s32.totalorder %s30, 0
      %p83 = por %p81, %p82
      %s85 = sadd.s32 %s84, 1
      %p88 = scmp.eq.s32.totalorder %s24, 1
      %p89 = scmp.ne.s32.totalorder %s84, %s86
      %p90 = scmp.eq.s32.totalorder %s24, 0
      %p91 = por %p89, %p90
      %p92 = scmp.ne.s32.totalorder %s84, %s86
      %p93 = scmp.eq.s32.totalorder %s29, 1
      %p94 = por %p92, %p93
      %p95 = scmp.ne.s32.totalorder %s86, %s87
      %p96 = scmp.eq.s32.totalorder %s29, 0
      %p97 = por %p95, %p96
      %p98 = scmp.ne.s32.totalorder %s86, %s87
      %p99 = scmp.eq.s32.totalorder %s30, 1
      %p100 = por %p98, %p99
      %p102 = scmp.ne.s32.totalorder %s87, %s101
      %p103 = scmp.eq.s32.totalorder %s30, 0
      %p104 = por %p102, %p103
      %s106 = sadd.s32 %s105, 1
      %p109 = scmp.eq.s32.totalorder %s24, 1
      %p110 = scmp.ne.s32.totalorder %s105, %s107
      %p111 = scmp.eq.s32.totalorder %s24, 0
      %p112 = por %p110, %p111
      %p113 = scmp.ne.s32.totalorder %s105, %s107
      %p114 = scmp.eq.s32.totalorder %s29, 1
      %p115 = por %p113, %p114
      %p116 = scmp.ne.s32.totalorder %s107, %s108
      %p117 = scmp.eq.s32.totalorder %s29, 0
      %p118 = por %p116, %p117
      %p119 = scmp.ne.s32.totalorder %s107, %s108
      %p120 = scmp.eq.s32.totalorder %s30, 1
      %p121 = por %p119, %p120
      %p123 = scmp.ne.s32.totalorder %s108, %s122
      %p124 = scmp.eq.s32.totalorder %s30, 0
      %p125 = por %p123, %p124
      %s127 = sadd.s32 %s126, 1
      %p130 = scmp.eq.s32.totalorder %s24, 1
      %p131 = scmp.ne.s32.totalorder %s126, %s128
      %p132 = scmp.eq.s32.totalorder %s24, 0
      %p133 = por %p131, %p132
      %p134 = scmp.ne.s32.totalorder %s126, %s128
      %p135 = scmp.eq.s32.totalorder %s29, 1
      %p136 = por %p134, %p135
      %p137 = scmp.ne.s32.totalorder %s128, %s129
      %p138 = scmp.eq.s32.totalorder %s29, 0
      %p139 = por %p137, %p138
      %p140 = scmp.ne.s32.totalorder %s128, %s129
      %p141 = scmp.eq.s32.totalorder %s30, 1
      %p142 = por %p140, %p141
      %p144 = scmp.ne.s32.totalorder %s129, %s143
      %p145 = scmp.eq.s32.totalorder %s30, 0
      %p146 = por %p144, %p145
      %s148 = sadd.s32 %s147, 1
      %p151 = scmp.eq.s32.totalorder %s24, 1
      %p152 = scmp.ne.s32.totalorder %s147, %s149
      %p153 = scmp.eq.s32.totalorder %s24, 0
      %p154 = por %p152, %p153
      %p155 = scmp.ne.s32.totalorder %s147, %s149
      %p156 = scmp.eq.s32.totalorder %s29, 1
      %p157 = por %p155, %p156
      %p158 = scmp.ne.s32.totalorder %s149, %s150
      %p159 = scmp.eq.s32.totalorder %s29, 0
      %p160 = por %p158, %p159
      %p161 = scmp.ne.s32.totalorder %s149, %s150
      %p162 = scmp.eq.s32.totalorder %s30, 1
      %p163 = por %p161, %p162
      %p165 = scmp.ne.s32.totalorder %s150, %s164
      %p166 = scmp.eq.s32.totalorder %s30, 0
      %p167 = por %p165, %p166
      %s169 = sadd.s32 %s168, 1
      %p172 = scmp.eq.s32.totalorder %s24, 1
      %p173 = scmp.ne.s32.totalorder %s168, %s170
      %p174 = scmp.eq.s32.totalorder %s24, 0
      %p175 = por %p173, %p174
      %p176 = scmp.ne.s32.totalorder %s168, %s170
      %p177 = scmp.eq.s32.totalorder %s29, 1
      %p178 = por %p176, %p177
      %p179 = scmp.ne.s32.totalorder %s170, %s171
      %p180 = scmp.eq.s32.totalorder %s29, 0
      %p181 = por %p179, %p180
      %p182 = scmp.ne.s32.totalorder %s170, %s171
      %p183 = scmp.eq.s32.totalorder %s30, 1
      %p184 = por %p182, %p183
      %p186 = scmp.ne.s32.totalorder %s171, %s185
      %p187 = scmp.eq.s32.totalorder %s30, 0
      %p188 = por %p186, %p187
      %s190 = sadd.s32 %s189, 1
      %p193 = scmp.eq.s32.totalorder %s24, 1
      %p194 = scmp.ne.s32.totalorder %s189, %s191
      %p195 = scmp.eq.s32.totalorder %s24, 0
      %p196 = por %p194, %p195
      %p197 = scmp.ne.s32.totalorder %s189, %s191
      %p198 = scmp.eq.s32.totalorder %s29, 1
      %p199 = por %p197, %p198
      %p200 = scmp.ne.s32.totalorder %s191, %s192
      %p201 = scmp.eq.s32.totalorder %s29, 0
      %p202 = por %p200, %p201
      %p203 = scmp.ne.s32.totalorder %s191, %s192
      %p204 = scmp.eq.s32.totalorder %s30, 1
      %p205 = por %p203, %p204
      %p207 = scmp.ne.s32.totalorder %s192, %s206
      %p208 = scmp.eq.s32.totalorder %s30, 0
      %p209 = por %p207, %p208
      %s210 = ssub.s32 %s24, %s31
      %p211 = scmp.eq.s32.totalorder %s210, 0
      %s213 = sadd.s32 %s212, 1
      %s214 = scalar_select %p211, %s212, %s213
      %p217 = pneg %p211
      %p218 = scmp.eq.s32.totalorder %s24, 1
      %p219 = por %p217, %p218
      %p220 = scmp.ne.s32.totalorder %s212, %s215
      %p221 = scmp.eq.s32.totalorder %s24, 0
      %p222 = por %p220, %p221
      %p223 = scmp.ne.s32.totalorder %s212, %s215
      %p224 = scmp.eq.s32.totalorder %s29, 1
      %p225 = por %p223, %p224
      %p226 = scmp.ne.s32.totalorder %s215, %s216
      %p227 = scmp.eq.s32.totalorder %s29, 0
      %p228 = por %p226, %p227
      %p229 = scmp.ne.s32.totalorder %s215, %s216
      %p230 = scmp.eq.s32.totalorder %s30, 1
      %p231 = por %p229, %p230
      %p233 = scmp.ne.s32.totalorder %s216, %s232
      %p234 = scmp.eq.s32.totalorder %s30, 0
      %p235 = por %p233, %p234
      %p236 = scmp.le.s32.totalorder 1, %s24
      %p237 = scmp.lt.s32.totalorder %s24, 3
      %p238 = pnand %p236, %p237
      %p239 = pneg %p238
      // Predicated region
      $region9: #{tpu_custom_call.1} parent=5 // pred_check
        _
      $region10: #{tpu_custom_call.1} parent=5 // pred_check_branch
        %241 = sbr.rel (%p238) target = $region12
      $region11: #{tpu_custom_call.1} parent=5 // pred_region
        %s242 = ssub.s32 %s24, 1
        // Predicated region
        $region13: #{tpu_custom_call.1} parent=11 // pred_check
          %p243 = pneg %p97
        $region14: #{tpu_custom_call.1} parent=11 // pred_check_branch
          %245 = sbr.rel (%p243) target = $region16
        $region15: #{tpu_custom_call.1} parent=11 // pred_region
          %247 = vsyncadd [#allocation6], 0
          %s248 = sshll.u32 %s2, 4
          %s249 = int_to_ptr.hbm [resolvable:$true] %s248
          %s250 = sshll.u32 [#allocation7], 4
          %s251 = int_to_ptr.vmem [resolvable:$true] %s250
          %256 = dma.hbm_to_vmem [thread:$0]  %s249, 512, %s251, [#allocation6], 128, 128, 8
        $region16: #{tpu_custom_call.1} parent=11 // pred_fallthru
          _
        // Predicated region
        $region17: #{tpu_custom_call.1} parent=11 // pred_check
          %p257 = pneg %p118
        $region18: #{tpu_custom_call.1} parent=11 // pred_check_branch
          %259 = sbr.rel (%p257) target = $region20
        $region19: #{tpu_custom_call.1} parent=11 // pred_region
          _
        $region20: #{tpu_custom_call.1} parent=11 // pred_fallthru
          _
        // Predicated region
        $region21: #{tpu_custom_call.1} parent=11 // pred_check
          %p260 = pneg %p139
        $region22: #{tpu_custom_call.1} parent=11 // pred_check_branch
          %262 = sbr.rel (%p260) target = $region24
        $region23: #{tpu_custom_call.1} parent=11 // pred_region
          %264 = vsyncadd [#allocation9], 0
          %s265 = sshll.u32 %s4, 4
          %s266 = int_to_ptr.hbm [resolvable:$true] %s265
          %s267 = sshll.u32 [#allocation8], 4
          %s268 = int_to_ptr.vmem [resolvable:$true] %s267
          %273 = dma.hbm_to_vmem [thread:$0]  %s266, 512, %s268, [#allocation9], 128, 128, 8
        $region24: #{tpu_custom_call.1} parent=11 // pred_fallthru
          _
        // Predicated region
        $region25: #{tpu_custom_call.1} parent=11 // pred_check
          %p274 = pneg %p160
        $region26: #{tpu_custom_call.1} parent=11 // pred_check_branch
          %276 = sbr.rel (%p274) target = $region28
        $region27: #{tpu_custom_call.1} parent=11 // pred_region
          _
        $region28: #{tpu_custom_call.1} parent=11 // pred_fallthru
          _
        // Predicated region
        $region29: #{tpu_custom_call.1} parent=11 // pred_check
          %p277 = pneg %p181
        $region30: #{tpu_custom_call.1} parent=11 // pred_check_branch
          %279 = sbr.rel (%p277) target = $region32
        $region31: #{tpu_custom_call.1} parent=11 // pred_region
          %281 = vsyncadd [#allocation9], 0
          %s282 = sshll.u32 %s6, 4
          %s283 = int_to_ptr.hbm [resolvable:$true] %s282
          %s284 = sshll.u32 [#allocation10], 4
          %s285 = int_to_ptr.vmem [resolvable:$true] %s284
          %290 = dma.hbm_to_vmem [thread:$0]  %s283, 512, %s285, [#allocation9], 128, 128, 8
        $region32: #{tpu_custom_call.1} parent=11 // pred_fallthru
          _
        // Predicated region
        $region33: #{tpu_custom_call.1} parent=11 // pred_check
          %p291 = pneg %p202
        $region34: #{tpu_custom_call.1} parent=11 // pred_check_branch
          %293 = sbr.rel (%p291) target = $region36
        $region35: #{tpu_custom_call.1} parent=11 // pred_region
          _
        $region36: #{tpu_custom_call.1} parent=11 // pred_fallthru
          _
      $region12: #{tpu_custom_call.1} parent=5 // pred_fallthru
        _
      %p294 = scmp.lt.s32.totalorder %s24, 2
      // Predicated region
      $region37: #{tpu_custom_call.1} parent=5 // pred_check
        %p295 = pneg %p294
      $region38: #{tpu_custom_call.1} parent=5 // pred_check_branch
        %297 = sbr.rel (%p295) target = $region40
      $region39: #{tpu_custom_call.1} parent=5 // pred_region
        // Predicated region
        $region41: #{tpu_custom_call.1} parent=39 // pred_check
          %p298 = pneg %p44
        $region42: #{tpu_custom_call.1} parent=39 // pred_check_branch
          %300 = sbr.rel (%p298) target = $region44
        $region43: #{tpu_custom_call.1} parent=39 // pred_region
          %s301 = sand.u32 %s34, 1
          %s302 = scalar_lea.sflag [#allocation3], %s301
          %s303 = sand.u32 %s34, 1
          %s304 = smul.addr %s303, 8
          %s305 = scalar_lea.vmem [#allocation2], %s304
          %307 = vsyncadd %s302, 0
          %s308 = smul.addr %s24, 8
          %s309 = scalar_lea.hbm %s0, %s308
          %s311 = sshll.u32 %s309, 4
          %s312 = int_to_ptr.hbm [resolvable:$true] %s311
          %s313 = sshll.u32 %s305, 4
          %s314 = int_to_ptr.vmem [resolvable:$true] %s313
          %316 = dma.hbm_to_vmem [thread:$0]  %s312, 128, %s314, %s302
        $region44: #{tpu_custom_call.1} parent=39 // pred_fallthru
          _
        // Predicated region
        $region45: #{tpu_custom_call.1} parent=39 // pred_check
          %p317 = pneg %p70
        $region46: #{tpu_custom_call.1} parent=39 // pred_check_branch
          %319 = sbr.rel (%p317) target = $region48
        $region47: #{tpu_custom_call.1} parent=39 // pred_region
          %s320 = sand.u32 %s24, 1
          %s321 = scalar_lea.sflag [#allocation6], %s320
          %s322 = sand.u32 %s60, 1
          %s323 = smul.addr %s322, 16
          %s324 = scalar_lea.vmem [#allocation5], %s323
          %326 = vsyncadd %s321, 0
          %s327 = smul.addr %s24, 2
          %s328 = smul.addr %s327, 8
          %s329 = scalar_lea.hbm %s1, %s328
          %s330 = sshll.u32 %s329, 4
          %s331 = int_to_ptr.hbm [resolvable:$true] %s330
          %s332 = sshll.u32 %s324, 4
          %s333 = int_to_ptr.vmem [resolvable:$true] %s332
          %338 = dma.hbm_to_vmem [thread:$0]  %s331, 256, %s333, %s321, 128, 128, 8
        $region48: #{tpu_custom_call.1} parent=39 // pred_fallthru
          _
      $region40: #{tpu_custom_call.1} parent=5 // pred_fallthru
        _
      %p339 = scmp.le.s32.totalorder 1, %s24
      %p340 = scmp.lt.s32.totalorder %s24, 3
      %p341 = pnand %p339, %p340
      %p342 = pneg %p341
      // Predicated region
      $region49: #{tpu_custom_call.1} parent=5 // pred_check
        _
      $region50: #{tpu_custom_call.1} parent=5 // pred_check_branch
        %344 = sbr.rel (%p341) target = $region52
      $region51: #{tpu_custom_call.1} parent=5 // pred_region
        %s345 = ssub.s32 %s24, 1
        %s346 = sand.u32 %s37, 1
        %s347 = scalar_lea.sflag [#allocation3], %s346
        %s348 = sand.u32 %s37, 1
        %s349 = smul.addr %s348, 8
        %s350 = scalar_lea.vmem [#allocation2], %s349
        // Predicated region
        $region53: #{tpu_custom_call.1} parent=51 // pred_check
          %p351 = pneg %p50
        $region54: #{tpu_custom_call.1} parent=51 // pred_check_branch
          %353 = sbr.rel (%p351) target = $region56
        $region55: #{tpu_custom_call.1} parent=51 // pred_region
          %355 = dma.done %s347, 128
        $region56: #{tpu_custom_call.1} parent=51 // pred_fallthru
          _
        %s356 = sand.u32 %s29, 1
        %s357 = scalar_lea.sflag [#allocation6], %s356
        %s358 = sand.u32 %s63, 1
        %s359 = smul.addr %s358, 16
        %s360 = scalar_lea.vmem [#allocation5], %s359
        // Predicated region
        $region57: #{tpu_custom_call.1} parent=51 // pred_check
          %p361 = pneg %p76
        $region58: #{tpu_custom_call.1} parent=51 // pred_check_branch
          %363 = sbr.rel (%p361) target = $region60
        $region59: #{tpu_custom_call.1} parent=51 // pred_region
          %365 = dma.done %s357, 256
        $region60: #{tpu_custom_call.1} parent=51 // pred_fallthru
          _
        // Predicated region
        $region61: #{tpu_custom_call.1} parent=51 // pred_check
          %p366 = pneg %p97
        $region62: #{tpu_custom_call.1} parent=51 // pred_check_branch
          %368 = sbr.rel (%p366) target = $region64
        $region63: #{tpu_custom_call.1} parent=51 // pred_region
          %370 = dma.done [#allocation6], 512
        $region64: #{tpu_custom_call.1} parent=51 // pred_fallthru
          _
        // Predicated region
        $region65: #{tpu_custom_call.1} parent=51 // pred_check
          %p371 = pneg %p139
        $region66: #{tpu_custom_call.1} parent=51 // pred_check_branch
          %373 = sbr.rel (%p371) target = $region68
        $region67: #{tpu_custom_call.1} parent=51 // pred_region
          %375 = dma.done [#allocation9], 512
        $region68: #{tpu_custom_call.1} parent=51 // pred_fallthru
          _
        // Predicated region
        $region69: #{tpu_custom_call.1} parent=51 // pred_check
          %p376 = pneg %p181
        $region70: #{tpu_custom_call.1} parent=51 // pred_check_branch
          %378 = sbr.rel (%p376) target = $region72
        $region71: #{tpu_custom_call.1} parent=51 // pred_region
          %380 = dma.done [#allocation9], 512
        $region72: #{tpu_custom_call.1} parent=51 // pred_fallthru
          _
        %s381 = sand.u32 %s37, 1
        %s382 = scalar_lea.sflag [#allocation3], %s381
        %s383 = sand.u32 %s37, 1
        %s384 = smul.addr %s383, 8
        %s385 = scalar_lea.vmem [#allocation2], %s384
        %p386 = pneg %p50
        %p387 = pneg %p47
        %s388 = sand.u32 %s29, 1
        %s389 = scalar_lea.sflag [#allocation6], %s388
        %s390 = sand.u32 %s63, 1
        %s391 = smul.addr %s390, 16
        %s392 = scalar_lea.vmem [#allocation5], %s391
        %p393 = pneg %p76
        %p394 = pneg %p73
        %p395 = pneg %p97
        %p396 = pneg %p94
        %p397 = pneg %p118
        %p398 = pneg %p115
        %p399 = pneg %p139
        %p400 = pneg %p136
        %p401 = pneg %p160
        %p402 = pneg %p157
        %p403 = pneg %p181
        %p404 = pneg %p178
        %p405 = pneg %p202
        %p406 = pneg %p199
        %p407 = pneg %p228
        %p408 = pneg %p225
        %s409 = sand.u32 %s215, 1
        %s410 = scalar_lea.sflag [#allocation4], %s409
        %s411 = sand.u32 %s215, 1
        %s412 = smul.addr %s411, 8
        %s413 = scalar_lea.vmem [#allocation11], %s412
        %v414 = vld [vmem:[%s350] sm:$0xff]
        %v415 = vld [vmem:[#allocation7] sm:$0xff]
        %v416 = vld [vmem:[#allocation7 + $0x8] sm:$0xff]
        %v417 = vld [vmem:[#allocation7 + $0x10] sm:$0xff]
        %v418 = vld [vmem:[#allocation7 + $0x18] sm:$0xff]
        %v419 = vld [vmem:[%s3] sm:$0x1]
        %v421 = vperm.slane %v419, 0
        %vm423 = vcmask 261120
        %v425 = vsel %vm423, %v414, 0
        %427 = vmatpush.msra.mxu0 0.0
        %428 = vmatpush.msra.mxu0 0.0
        %429 = vmatpush.msra.mxu0 0.0
        %430 = vmatpush.msra.mxu0 0.0
        %431 = vmatpush.msra.mxu0 0.0
        %432 = vmatpush.msra.mxu0 0.0
        %433 = vmatpush.msra.mxu0 0.0
        %434 = vmatpush.msra.mxu0 0.0
        %435 = vmatpush.msra.mxu0 0.0
        %436 = vmatpush.msra.mxu0 0.0
        %437 = vmatpush.msra.mxu0 0.0
        %438 = vmatpush.msra.mxu0 0.0
        %439 = vmatpush.msra.mxu0 %v418
        %440 = vmatpush.msra.mxu0 %v417
        %441 = vmatpush.msra.mxu0 %v416
        %442 = vmatpush.msra.mxu0 %v415
        %443 = vmatmul.f32.gmra.mxu0 %v425
        %v444 = vpop.f32.mrf.mxu0
        %v445 = vadd.f32 %v421, %v444
        %446 = vdwg.mxu0
        %v447 = vld [vmem:[%s360] sm:$0xff]
        %v448 = vld [vmem:[%s360 + $0x8] sm:$0xff]
        %v449 = vld [vmem:[#allocation8] sm:$0xff]
        %v450 = vld [vmem:[#allocation8 + $0x8] sm:$0xff]
        %v451 = vld [vmem:[#allocation8 + $0x10] sm:$0xff]
        %v452 = vld [vmem:[#allocation8 + $0x18] sm:$0xff]
        %v453 = vld [vmem:[%s5] sm:$0x1]
        %v455 = vperm.slane %v453, 0
        %v458 = vsel %vm423, %v447, 0
        %v461 = vsel %vm423, %v448, 0
        %463 = vmatpush.msra.mxu0 0.0
        %464 = vmatpush.msra.mxu0 0.0
        %465 = vmatpush.msra.mxu0 0.0
        %466 = vmatpush.msra.mxu0 0.0
        %467 = vmatpush.msra.mxu0 0.0
        %468 = vmatpush.msra.mxu0 0.0
        %469 = vmatpush.msra.mxu0 0.0
        %470 = vmatpush.msra.mxu0 0.0
        %471 = vmatpush.msra.mxu0 0.0
        %472 = vmatpush.msra.mxu0 0.0
        %473 = vmatpush.msra.mxu0 0.0
        %474 = vmatpush.msra.mxu0 0.0
        %475 = vmatpush.msra.mxu0 %v452
        %476 = vmatpush.msra.mxu0 %v451
        %477 = vmatpush.msra.mxu0 %v450
        %478 = vmatpush.msra.mxu0 %v449
        %479 = vmatmul.f32.gmra.mxu0 %v458
        %v480 = vpop.f32.mrf.mxu0
        %v481 = vadd.f32 %v455, %v480
        %482 = vmatmul.f32.gmra.mxu0 %v461
        %v483 = vpop.f32.mrf.mxu0
        %v484 = vadd.f32 %v455, %v483
        %485 = vdwg.mxu0
        %487 = vrot.lane.b32.xlu0 %v445, 120
        %v488 = vpop.permute.xlu0 %487
        %489 = vrot.lane.b32.xlu0 %v445, 112
        %v490 = vpop.permute.xlu0 %489
        %491 = vrot.lane.b32.xlu0 %v445, 104
        %v492 = vpop.permute.xlu0 %491
        %495 = vrot.lane.b32.xlu0 %v481, 120
        %v496 = vpop.permute.xlu0 %495
        %497 = vrot.lane.b32.xlu0 %v484, 120
        %v498 = vpop.permute.xlu0 %497
        %499 = vrot.lane.b32.xlu0 %v481, 112
        %v500 = vpop.permute.xlu0 %499
        %501 = vrot.lane.b32.xlu0 %v484, 112
        %v502 = vpop.permute.xlu0 %501
        %503 = vrot.lane.b32.xlu0 %v481, 104
        %v504 = vpop.permute.xlu0 %503
        %505 = vrot.lane.b32.xlu0 %v484, 104
        %v506 = vpop.permute.xlu0 %505
        %vm507 = vcmask 64512
        %v508 = vsel %vm507, %v445, 0
        %v510 = vsel %vm507, %v481, 0
        %v512 = vsel %vm507, %v484, 0
        %514 = vmatpush.xpose.msra.mxu0 0.0
        %515 = vmatpush.xpose.msra.mxu0 0.0
        %516 = vmatpush.xpose.msra.mxu0 0.0
        %517 = vmatpush.xpose.msra.mxu0 0.0
        %518 = vmatpush.xpose.msra.mxu0 0.0
        %519 = vmatpush.xpose.msra.mxu0 0.0
        %520 = vmatpush.xpose.msra.mxu0 0.0
        %521 = vmatpush.xpose.msra.mxu0 0.0
        %522 = vmatpush.xpose.msra.mxu0 0.0
        %523 = vmatpush.xpose.msra.mxu0 0.0
        %524 = vmatpush.xpose.msra.mxu0 0.0
        %525 = vmatpush.xpose.msra.mxu0 0.0
        %526 = vmatpush.xpose.msra.mxu0 0.0
        %527 = vmatpush.xpose.msra.mxu0 0.0
        %528 = vmatpush.xpose.msra.mxu0 %v512
        %529 = vmatpush.xpose.msra.mxu0 %v510
        %530 = vmatmul.f32.gmra.mxu0 %v508
        %v531 = vpop.f32.mrf.mxu0
        %v532 = vadd.f32 0.0, %v531
        %533 = vdwg.mxu0
        %v534 = vsel %vm507, %v488, 0
        %v536 = vsel %vm507, %v496, 0
        %v538 = vsel %vm507, %v498, 0
        %540 = vmatpush.xpose.msra.mxu0 0.0
        %541 = vmatpush.xpose.msra.mxu0 0.0
        %542 = vmatpush.xpose.msra.mxu0 0.0
        %543 = vmatpush.xpose.msra.mxu0 0.0
        %544 = vmatpush.xpose.msra.mxu0 0.0
        %545 = vmatpush.xpose.msra.mxu0 0.0
        %546 = vmatpush.xpose.msra.mxu0 0.0
        %547 = vmatpush.xpose.msra.mxu0 0.0
        %548 = vmatpush.xpose.msra.mxu0 0.0
        %549 = vmatpush.xpose.msra.mxu0 0.0
        %550 = vmatpush.xpose.msra.mxu0 0.0
        %551 = vmatpush.xpose.msra.mxu0 0.0
        %552 = vmatpush.xpose.msra.mxu0 0.0
        %553 = vmatpush.xpose.msra.mxu0 0.0
        %554 = vmatpush.xpose.msra.mxu0 %v538
        %555 = vmatpush.xpose.msra.mxu0 %v536
        %556 = vmatmul.f32.gmra.mxu0 %v534
        %v557 = vpop.f32.mrf.mxu0
        %v558 = vadd.f32 0.0, %v557
        %559 = vdwg.mxu0
        %v560 = vsel %vm507, %v490, 0
        %v562 = vsel %vm507, %v500, 0
        %v564 = vsel %vm507, %v502, 0
        %566 = vmatpush.xpose.msra.mxu0 0.0
        %567 = vmatpush.xpose.msra.mxu0 0.0
        %568 = vmatpush.xpose.msra.mxu0 0.0
        %569 = vmatpush.xpose.msra.mxu0 0.0
        %570 = vmatpush.xpose.msra.mxu0 0.0
        %571 = vmatpush.xpose.msra.mxu0 0.0
        %572 = vmatpush.xpose.msra.mxu0 0.0
        %573 = vmatpush.xpose.msra.mxu0 0.0
        %574 = vmatpush.xpose.msra.mxu0 0.0
        %575 = vmatpush.xpose.msra.mxu0 0.0
        %576 = vmatpush.xpose.msra.mxu0 0.0
        %577 = vmatpush.xpose.msra.mxu0 0.0
        %578 = vmatpush.xpose.msra.mxu0 0.0
        %579 = vmatpush.xpose.msra.mxu0 0.0
        %580 = vmatpush.xpose.msra.mxu0 %v564
        %581 = vmatpush.xpose.msra.mxu0 %v562
        %582 = vmatmul.f32.gmra.mxu0 %v560
        %v583 = vpop.f32.mrf.mxu0
        %v584 = vadd.f32 0.0, %v583
        %585 = vdwg.mxu0
        %v586 = vsel %vm507, %v492, 0
        %v588 = vsel %vm507, %v504, 0
        %v590 = vsel %vm507, %v506, 0
        %592 = vmatpush.xpose.msra.mxu0 0.0
        %593 = vmatpush.xpose.msra.mxu0 0.0
        %594 = vmatpush.xpose.msra.mxu0 0.0
        %595 = vmatpush.xpose.msra.mxu0 0.0
        %596 = vmatpush.xpose.msra.mxu0 0.0
        %597 = vmatpush.xpose.msra.mxu0 0.0
        %598 = vmatpush.xpose.msra.mxu0 0.0
        %599 = vmatpush.xpose.msra.mxu0 0.0
        %600 = vmatpush.xpose.msra.mxu0 0.0
        %601 = vmatpush.xpose.msra.mxu0 0.0
        %602 = vmatpush.xpose.msra.mxu0 0.0
        %603 = vmatpush.xpose.msra.mxu0 0.0
        %604 = vmatpush.xpose.msra.mxu0 0.0
        %605 = vmatpush.xpose.msra.mxu0 0.0
        %606 = vmatpush.xpose.msra.mxu0 %v590
        %607 = vmatpush.xpose.msra.mxu0 %v588
        %608 = vmatmul.f32.gmra.mxu0 %v586
        %v609 = vpop.f32.mrf.mxu0
        %v610 = vadd.f32 0.0, %v609
        %611 = vdwg.mxu0
        %vm612 = vcmask 130048
        %v613 = vsel %vm612, %v532, -inf
        %614 = vmax.xlane.f32.xlu0 %v613
        %v615 = vpop.xlane.xlu0 %614
        %v616 = vsel %vm612, %v558, -inf
        %617 = vmax.xlane.f32.xlu0 %v616
        %v618 = vpop.xlane.xlu0 %617
        %v619 = vsel %vm612, %v584, -inf
        %620 = vmax.xlane.f32.xlu0 %v619
        %v621 = vpop.xlane.xlu0 %620
        %v622 = vsel %vm612, %v610, -inf
        %623 = vmax.xlane.f32.xlu0 %v622
        %v624 = vpop.xlane.xlu0 %623
        %v625 = vsub.f32 %v532, %v615
        %v626 = vsub.f32 %v558, %v618
        %v627 = vsub.f32 %v584, %v621
        %v628 = vsub.f32 %v610, %v624
        %v629 = vmul.f32 %v625, 1.442695
        %v630 = vpow.pop %v629
        %v631 = vmul.f32 %v626, 1.442695
        %v632 = vpow.pop %v631
        %v633 = vmul.f32 %v627, 1.442695
        %v634 = vpow.pop %v633
        %v635 = vmul.f32 %v628, 1.442695
        %v636 = vpow.pop %v635
        %v637 = vsel %vm612, %v630, 0.0
        %638 = vadd.xlane.f32.xlu0 %v637
        %v639 = vpop.xlane.xlu0 %638
        %v640 = vsel %vm612, %v632, 0.0
        %641 = vadd.xlane.f32.xlu0 %v640
        %v642 = vpop.xlane.xlu0 %641
        %v643 = vsel %vm612, %v634, 0.0
        %644 = vadd.xlane.f32.xlu0 %v643
        %v645 = vpop.xlane.xlu0 %644
        %v646 = vsel %vm612, %v636, 0.0
        %647 = vadd.xlane.f32.xlu0 %v646
        %v648 = vpop.xlane.xlu0 %647
        %v649 = vrcp.pop %v639
        %v650 = vmul.f32 %v639, %v649
        %v651 = vsub.f32 1.0, %v650
        %v652 = vmul.f32 %v649, %v651
        %v653 = vadd.f32 %v649, %v652
        %vm654 = vweird.f32 %v639
        %vm655 = vweird.f32 %v649
        %vm656 = vmor %vm654, %vm655
        %v657 = vsel %vm656, %v649, %v653
        %v658 = vand.u32 2147483647, %v639
        %vm659 = vcmp.eq.f32.partialorder %v658, 8.507059e+37
        %v660 = vand.u32 %v639, 2147483648
        %v661 = vor.u32 1.1754944e-38, %v660
        %v662 = vsel %vm659, %v661, %v657
        %v663 = vmul.f32 1.0, %v662
        %v664 = vrcp.pop %v642
        %v665 = vmul.f32 %v642, %v664
        %v666 = vsub.f32 1.0, %v665
        %v667 = vmul.f32 %v664, %v666
        %v668 = vadd.f32 %v664, %v667
        %vm669 = vweird.f32 %v642
        %vm670 = vweird.f32 %v664
        %vm671 = vmor %vm669, %vm670
        %v672 = vsel %vm671, %v664, %v668
        %v673 = vand.u32 2147483647, %v642
        %vm674 = vcmp.eq.f32.partialorder %v673, 8.507059e+37
        %v675 = vand.u32 %v642, 2147483648
        %v676 = vor.u32 1.1754944e-38, %v675
        %v677 = vsel %vm674, %v676, %v672
        %v678 = vmul.f32 1.0, %v677
        %v679 = vrcp.pop %v645
        %v680 = vmul.f32 %v645, %v679
        %v681 = vsub.f32 1.0, %v680
        %v682 = vmul.f32 %v679, %v681
        %v683 = vadd.f32 %v679, %v682
        %vm684 = vweird.f32 %v645
        %vm685 = vweird.f32 %v679
        %vm686 = vmor %vm684, %vm685
        %v687 = vsel %vm686, %v679, %v683
        %v688 = vand.u32 2147483647, %v645
        %vm689 = vcmp.eq.f32.partialorder %v688, 8.507059e+37
        %v690 = vand.u32 %v645, 2147483648
        %v691 = vor.u32 1.1754944e-38, %v690
        %v692 = vsel %vm689, %v691, %v687
        %v693 = vmul.f32 1.0, %v692
        %v694 = vrcp.pop %v648
        %v695 = vmul.f32 %v648, %v694
        %v696 = vsub.f32 1.0, %v695
        %v697 = vmul.f32 %v694, %v696
        %v698 = vadd.f32 %v694, %v697
        %vm699 = vweird.f32 %v648
        %vm700 = vweird.f32 %v694
        %vm701 = vmor %vm699, %vm700
        %v702 = vsel %vm701, %v694, %v698
        %v703 = vand.u32 2147483647, %v648
        %vm704 = vcmp.eq.f32.partialorder %v703, 8.507059e+37
        %v705 = vand.u32 %v648, 2147483648
        %v706 = vor.u32 1.1754944e-38, %v705
        %v707 = vsel %vm704, %v706, %v702
        %v708 = vmul.f32 1.0, %v707
        %709 = vrot.lane.b32.xlu0 %v481, 96
        %v710 = vpop.permute.xlu0 %709
        %711 = vrot.lane.b32.xlu0 %v484, 96
        %v712 = vpop.permute.xlu0 %711
        %v716 = vsel %vm612, %v630, 0
        %718 = vmatpush.msra.mxu0 0.0
        %719 = vmatpush.msra.mxu0 0.0
        %720 = vmatpush.msra.mxu0 0.0
        %721 = vmatpush.msra.mxu0 0.0
        %722 = vmatpush.msra.mxu0 0.0
        %723 = vmatpush.msra.mxu0 0.0
        %724 = vmatpush.msra.mxu0 0.0
        %725 = vmatpush.msra.mxu0 0.0
        %726 = vmatpush.msra.mxu0 0.0
        %727 = vmatpush.msra.mxu0 0.0
        %728 = vmatpush.msra.mxu0 0.0
        %729 = vmatpush.msra.mxu0 0.0
        %730 = vmatpush.msra.mxu0 0.0
        %731 = vmatpush.msra.mxu0 0.0
        %732 = vmatpush.msra.mxu0 %v712
        %733 = vmatpush.msra.mxu0 %v710
        %734 = vmatmul.f32.gmra.mxu0 %v716
        %v735 = vpop.f32.mrf.mxu0
        %v736 = vadd.f32 0.0, %v735
        %737 = vdwg.mxu0
        %738 = vrot.lane.b32.xlu0 %v496, 96
        %v739 = vpop.permute.xlu0 %738
        %740 = vrot.lane.b32.xlu0 %v498, 96
        %v741 = vpop.permute.xlu0 %740
        %v745 = vsel %vm612, %v632, 0
        %747 = vmatpush.msra.mxu0 0.0
        %748 = vmatpush.msra.mxu0 0.0
        %749 = vmatpush.msra.mxu0 0.0
        %750 = vmatpush.msra.mxu0 0.0
        %751 = vmatpush.msra.mxu0 0.0
        %752 = vmatpush.msra.mxu0 0.0
        %753 = vmatpush.msra.mxu0 0.0
        %754 = vmatpush.msra.mxu0 0.0
        %755 = vmatpush.msra.mxu0 0.0
        %756 = vmatpush.msra.mxu0 0.0
        %757 = vmatpush.msra.mxu0 0.0
        %758 = vmatpush.msra.mxu0 0.0
        %759 = vmatpush.msra.mxu0 0.0
        %760 = vmatpush.msra.mxu0 0.0
        %761 = vmatpush.msra.mxu0 %v741
        %762 = vmatpush.msra.mxu0 %v739
        %763 = vmatmul.f32.gmra.mxu0 %v745
        %v764 = vpop.f32.mrf.mxu0
        %v765 = vadd.f32 0.0, %v764
        %766 = vdwg.mxu0
        %767 = vrot.lane.b32.xlu0 %v500, 96
        %v768 = vpop.permute.xlu0 %767
        %769 = vrot.lane.b32.xlu0 %v502, 96
        %v770 = vpop.permute.xlu0 %769
        %v774 = vsel %vm612, %v634, 0
        %776 = vmatpush.msra.mxu0 0.0
        %777 = vmatpush.msra.mxu0 0.0
        %778 = vmatpush.msra.mxu0 0.0
        %779 = vmatpush.msra.mxu0 0.0
        %780 = vmatpush.msra.mxu0 0.0
        %781 = vmatpush.msra.mxu0 0.0
        %782 = vmatpush.msra.mxu0 0.0
        %783 = vmatpush.msra.mxu0 0.0
        %784 = vmatpush.msra.mxu0 0.0
        %785 = vmatpush.msra.mxu0 0.0
        %786 = vmatpush.msra.mxu0 0.0
        %787 = vmatpush.msra.mxu0 0.0
        %788 = vmatpush.msra.mxu0 0.0
        %789 = vmatpush.msra.mxu0 0.0
        %790 = vmatpush.msra.mxu0 %v770
        %791 = vmatpush.msra.mxu0 %v768
        %792 = vmatmul.f32.gmra.mxu0 %v774
        %v793 = vpop.f32.mrf.mxu0
        %v794 = vadd.f32 0.0, %v793
        %795 = vdwg.mxu0
        %796 = vrot.lane.b32.xlu0 %v504, 96
        %v797 = vpop.permute.xlu0 %796
        %798 = vrot.lane.b32.xlu0 %v506, 96
        %v799 = vpop.permute.xlu0 %798
        %v803 = vsel %vm612, %v636, 0
        %805 = vmatpush.msra.mxu0 0.0
        %806 = vmatpush.msra.mxu0 0.0
        %807 = vmatpush.msra.mxu0 0.0
        %808 = vmatpush.msra.mxu0 0.0
        %809 = vmatpush.msra.mxu0 0.0
        %810 = vmatpush.msra.mxu0 0.0
        %811 = vmatpush.msra.mxu0 0.0
        %812 = vmatpush.msra.mxu0 0.0
        %813 = vmatpush.msra.mxu0 0.0
        %814 = vmatpush.msra.mxu0 0.0
        %815 = vmatpush.msra.mxu0 0.0
        %816 = vmatpush.msra.mxu0 0.0
        %817 = vmatpush.msra.mxu0 0.0
        %818 = vmatpush.msra.mxu0 0.0
        %819 = vmatpush.msra.mxu0 %v799
        %820 = vmatpush.msra.mxu0 %v797
        %821 = vmatmul.f32.gmra.mxu0 %v803
        %v822 = vpop.f32.mrf.mxu0
        %v823 = vadd.f32 0.0, %v822
        %824 = vdwg.mxu0
        %v825 = vmul.f32 %v736, %v663
        %v826 = vmul.f32 %v765, %v678
        %v827 = vmul.f32 %v794, %v693
        %v828 = vmul.f32 %v823, %v708
        %830 = vrot.lane.b32.xlu0 %v826, 8
        %v831 = vpop.permute.xlu0 %830
        %834 = vrot.lane.b32.xlu0 %v827, 16
        %v835 = vpop.permute.xlu0 %834
        %838 = vrot.lane.b32.xlu0 %v828, 24
        %v839 = vpop.permute.xlu0 %838
        %v841 = vsel %vm507, %v825, %v831
        %v842 = vsel %vm612, %v841, %v835
        %vm843 = vcmask 195584
        %v844 = vsel %vm843, %v842, %v839
        %v845 = vld [vmem:[#allocation10] sm:$0xff]
        %v846 = vld [vmem:[#allocation10 + $0x8] sm:$0xff]
        %v847 = vld [vmem:[#allocation10 + $0x10] sm:$0xff]
        %v848 = vld [vmem:[#allocation10 + $0x18] sm:$0xff]
        %v849 = vld [vmem:[%s7] sm:$0x1]
        %v851 = vperm.slane %v849, 0
        %v854 = vsel %vm423, %v844, 0
        %856 = vmatpush.msra.mxu0 0.0
        %857 = vmatpush.msra.mxu0 0.0
        %858 = vmatpush.msra.mxu0 0.0
        %859 = vmatpush.msra.mxu0 0.0
        %860 = vmatpush.msra.mxu0 0.0
        %861 = vmatpush.msra.mxu0 0.0
        %862 = vmatpush.msra.mxu0 0.0
        %863 = vmatpush.msra.mxu0 0.0
        %864 = vmatpush.msra.mxu0 0.0
        %865 = vmatpush.msra.mxu0 0.0
        %866 = vmatpush.msra.mxu0 0.0
        %867 = vmatpush.msra.mxu0 0.0
        %868 = vmatpush.msra.mxu0 %v848
        %869 = vmatpush.msra.mxu0 %v847
        %870 = vmatpush.msra.mxu0 %v846
        %871 = vmatpush.msra.mxu0 %v845
        %872 = vmatmul.f32.gmra.mxu0 %v854
        %v873 = vpop.f32.mrf.mxu0
        %v874 = vadd.f32 %v851, %v873
        %875 = vdwg.mxu0
        %876 = vst.msk [vmem:[%s413] sm:$0xff] %vm423, %v874
        %s877 = sand.u32 %s215, 1
        %s878 = scalar_lea.sflag [#allocation4], %s877
        %s879 = sand.u32 %s215, 1
        %s880 = smul.addr %s879, 8
        %s881 = scalar_lea.vmem [#allocation11], %s880
        // Predicated region
        $region73: #{tpu_custom_call.1} parent=51 // pred_check
          %p882 = pneg %p225
        $region74: #{tpu_custom_call.1} parent=51 // pred_check_branch
          %884 = sbr.rel (%p882) target = $region76
        $region75: #{tpu_custom_call.1} parent=51 // pred_region
          %886 = vsyncadd %s878, 0
          %s887 = smul.addr %s29, 8
          %s888 = scalar_lea.hbm %s8, %s887
          %s890 = sshll.u32 %s881, 4
          %s891 = int_to_ptr.vmem [resolvable:$true] %s890
          %s892 = sshll.u32 %s888, 4
          %s893 = int_to_ptr.hbm [resolvable:$true] %s892
          %895 = dma.vmem_to_hbm [thread:$0]  %s891, 128, %s893, %s878
        $region76: #{tpu_custom_call.1} parent=51 // pred_fallthru
          _
      $region52: #{tpu_custom_call.1} parent=5 // pred_fallthru
        _
      %p896 = scmp.le.s32.totalorder 2, %s24
      // Predicated region
      $region77: #{tpu_custom_call.1} parent=5 // pred_check
        %p897 = pneg %p896
      $region78: #{tpu_custom_call.1} parent=5 // pred_check_branch
        %899 = sbr.rel (%p897) target = $region80
      $region79: #{tpu_custom_call.1} parent=5 // pred_region
        %s900 = ssub.s32 %s24, 2
        // Predicated region
        $region81: #{tpu_custom_call.1} parent=79 // pred_check
          %p901 = pneg %p231
        $region82: #{tpu_custom_call.1} parent=79 // pred_check_branch
          %903 = sbr.rel (%p901) target = $region84
        $region83: #{tpu_custom_call.1} parent=79 // pred_region
          %s904 = sand.u32 %s216, 1
          %s905 = scalar_lea.sflag [#allocation4], %s904
          %s906 = sand.u32 %s216, 1
          %s907 = smul.addr %s906, 8
          %s908 = scalar_lea.vmem [#allocation11], %s907
          %910 = dma.done %s905, 128
        $region84: #{tpu_custom_call.1} parent=79 // pred_fallthru
          _
      $region80: #{tpu_custom_call.1} parent=5 // pred_fallthru
        _
    $region6: #{tpu_custom_call.1} parent=1 // loop_footer
      %s28 = sadd.s32 1, %s24
    $region7: #{tpu_custom_call.1} parent=1 // loop_footer_branch
      %23 = sbr.rel target = $region3
    $region8: #{tpu_custom_call.1} parent=1 // loop_exit
      _
    %911 = vsyncpa [#allocation3], 1
    %s912 = scalar_lea.sflag [#allocation3], 1
    %913 = vsyncpa %s912, 1
    %914 = vsyncpa [#allocation6], 1
    %s915 = scalar_lea.sflag [#allocation6], 1
    %916 = vsyncpa %s915, 1
    %917 = vsyncpa [#allocation9], 1
    %918 = vsyncpa [#allocation4], 1
    %s919 = scalar_lea.sflag [#allocation4], 1
    %920 = vsyncpa %s919, 1

</llo_original>
